<compile_context>
chip_gen: v5e
topology: v5e:2x2
jax: 0.10.0
libtpu: 0.0.40
codegen_flags: <defaults>
</compile_context>

<pallas_src>
import math

import jax
import jax.numpy as jnp
from jax.experimental import pallas as pl
from jax.experimental.pallas import tpu as pltpu


def _rotate_matmul_kernel(x_ref, sel_ref, o_ref):
    """One MXU pass: (TILE_M, HW_src) @ (HW_src, TILE_N) -> (TILE_M, TILE_N).

    x_ref:   VMEM (TILE_M, HW_src)   pixel rows (B*C merged into M)
    sel_ref: VMEM (HW_src, TILE_N)   0/1 selection-matrix column tile
    o_ref:   VMEM (TILE_M, TILE_N)   rotated output tile
    """
    x = x_ref[...]
    if not jnp.issubdtype(x.dtype, jnp.floating):
        # Integer images: exact in f32 (sel is a 0/1 permutation-like matrix).
        x = x.astype(jnp.float32)
    o_ref[...] = jnp.dot(
        x, sel_ref[...], preferred_element_type=jnp.float32
    ).astype(o_ref.dtype)


def _nearest_src_indices(H, W, rad):
    """torchvision rotate (expand=False, center=None, NEAREST) inverse mapping.

    Returns (src_flat, valid), each of shape (H*W,), mapping every destination
    pixel to its nearest source pixel (half-to-even rounding == grid_sample's
    nearbyint) and whether it lands in bounds (out-of-bounds -> 0 fill).
    """
    HW = H * W
    k = jnp.arange(HW, dtype=jnp.int32)
    i = (k // W).astype(jnp.float32)
    j = (k % W).astype(jnp.float32)
    cos_a = jnp.cos(rad).astype(jnp.float32)
    sin_a = jnp.sin(rad).astype(jnp.float32)
    x_base = j - (W - 1) * 0.5
    y_base = i - (H - 1) * 0.5
    x_src = x_base * cos_a - y_base * sin_a + (W - 1) * 0.5
    y_src = x_base * sin_a + y_base * cos_a + (H - 1) * 0.5
    xi = jnp.round(x_src).astype(jnp.int32)
    yi = jnp.round(y_src).astype(jnp.int32)
    valid = (xi >= 0) & (xi < W) & (yi >= 0) & (yi < H)
    src_flat = yi * W + xi
    return src_flat, valid


def rotate(img, level, *, random_direction: bool = True, key=None):
    """JAX/Pallas equivalent of Rotate(random_direction, NEAREST, expand=False).forward."""
    B, C, H, W = img.shape
    HW = H * W
    M = B * C

    level = jnp.asarray(level, jnp.float32)
    if random_direction:
        if key is None:
            # TODO(synk): torch.rand(1) draws fresh randomness every call; with
            # key=None this sign flip is deterministic across calls.
            key = jax.random.PRNGKey(0)
        flip = jax.random.uniform(key, ()) > 0.5
        level = jnp.where(flip, -level, level)
    rad = level * (math.pi / 180.0)

    # ---- selection matrix: angle-only, built ONCE here (not per grid step) ----
    src_flat, valid = _nearest_src_indices(H, W, rad)
    sel_dtype = jnp.bfloat16 if img.dtype == jnp.bfloat16 else jnp.float32
    l = jnp.arange(HW, dtype=jnp.int32)[:, None]                    # (HW_src, 1)
    sel = ((l == src_flat[None, :]) & valid[None, :]).astype(sel_dtype)

    # ---- tiling ----
    HW_pad = ((HW + 127) // 128) * 128          # lane-align destination axis
    if HW_pad != HW:
        sel = jnp.pad(sel, ((0, 0), (0, HW_pad - HW)))
    # 256-wide dst tiles for the v6e/v7x 256x256 MXU when they divide evenly
    # (and there are several of them); otherwise 128 (matches v5e's 128-wide
    # MXU and keeps >=2 parallel grid steps for v7x's two TensorCores).
    TILE_N = 256 if (HW_pad % 256 == 0 and HW_pad >= 512) else 128
    # B*C merged into the matmul M dimension; tile only when it is large.
    TILE_M = 128 if (M >= 256 and M % 128 == 0) else M
    num_n = HW_pad // TILE_N
    num_m = M // TILE_M

    x2 = img.reshape(M, HW)

    itemsize = jnp.dtype(img.dtype).itemsize
    est = 2 * (TILE_M * HW * itemsize
               + HW * TILE_N * jnp.dtype(sel_dtype).itemsize
               + TILE_M * TILE_N * itemsize)     # double-buffered working set
    vmem_limit = int(min(max(4 * est, 32 << 20), 56 << 20))

    # TODO(synk): the one-hot-matmul rotation is O(HW^2) in FLOPs/HBM; for large
    # images a 3-shear (pltpu.roll / pl.ds) formulation would be O(C*HW).

    out = pl.pallas_call(
        _rotate_matmul_kernel,
        out_shape=jax.ShapeDtypeStruct((M, HW_pad), img.dtype),
        grid=(num_n, num_m),   # m fastest: sel column tile DMA elided across m
        in_specs=[
            pl.BlockSpec((TILE_M, HW), lambda n, m: (m, 0)),        # pixel rows
            pl.BlockSpec((HW, TILE_N), lambda n, m: (0, n)),        # sel columns
        ],
        out_specs=pl.BlockSpec((TILE_M, TILE_N), lambda n, m: (m, n)),
        compiler_params=pltpu.CompilerParams(
            dimension_semantics=("parallel", "parallel"),
            vmem_limit_bytes=vmem_limit),
    )(x2, sel)

    return out[:, :HW].reshape(B, C, H, W)


if __name__ == "__main__":
    key = jax.random.PRNGKey(0)
    k_img, k_dir = jax.random.split(key)

    B, C, H, W = 2, 4, 16, 16
    img = jax.random.uniform(k_img, (B, C, H, W), dtype=jnp.float32)
    level = 30.0  # degrees (pixmix_max_level)

    # Sanity 1: level=0, no random flip -> identity.
    ident = rotate(img, 0.0, random_direction=False)
    jax.block_until_ready(ident)
    assert jnp.allclose(ident, img), "identity rotation mismatch"

    # Sanity 2: fixed +30deg rotation vs a pure-JAX gather reference.
    out_rot = rotate(img, level, random_direction=False)
    jax.block_until_ready(out_rot)
    rad_ref = jnp.asarray(level, jnp.float32) * (math.pi / 180.0)
    src_flat, valid = _nearest_src_indices(H, W, rad_ref)
    x2 = img.reshape(B * C, H * W)
    ref = jnp.where(
        valid[None, :],
        jnp.take(x2, jnp.clip(src_flat, 0, H * W - 1), axis=1),
        0.0,
    ).reshape(B, C, H, W).astype(img.dtype)
    assert jnp.allclose(out_rot, ref), "rotation mismatch vs gather reference"

    # Forward-pass semantics with the random sign flip.
    out = rotate(img, level, random_direction=True, key=k_dir)
    jax.block_until_ready(out)
    assert out.shape == img.shape and out.dtype == img.dtype

    print("KERNEL_OK")
</pallas_src>

<mosaic_0001>
module attributes {stable_mosaic.version = 11 : i64} {
  func.func @_rotate_matmul_kernel(%arg0: i32, %arg1: i32, %arg2: memref<8x256xf32, #tpu.memory_space<vmem>>, %arg3: memref<256x128xf32, #tpu.memory_space<vmem>>, %arg4: memref<8x128xf32, #tpu.memory_space<vmem>>) attributes {dimension_semantics = [#tpu.dimension_semantics<parallel>, #tpu.dimension_semantics<parallel>], iteration_bounds = array<i64: 2, 1>, scalar_prefetch = 0 : i64, scratch_operands = 0 : i64, tpu.core_type = #tpu.core_type<tc>, window_params = [{transform_indices = @transform_0, window_bounds = array<i64: 8, 256>}, {transform_indices = @transform_1, window_bounds = array<i64: 256, 128>}, {transform_indices = @transform_2, window_bounds = array<i64: 8, 128>}]} {
    %c0 = arith.constant 0 : index
    %c0_0 = arith.constant 0 : index
    %0 = vector.load %arg2[%c0, %c0_0] : memref<8x256xf32, #tpu.memory_space<vmem>>, vector<8x256xf32>
    %c0_1 = arith.constant 0 : index
    %c0_2 = arith.constant 0 : index
    %1 = vector.load %arg3[%c0_1, %c0_2] : memref<256x128xf32, #tpu.memory_space<vmem>>, vector<256x128xf32>
    %cst = arith.constant dense<0.000000e+00> : vector<8x128xf32>
    %2 = tpu.matmul %0, %1, %cst {dimension_numbers = #tpu.dot_dimension_numbers<[1], [0], [0], [1], [0, 0, 1, 1], [], []>} : vector<8x256xf32>, vector<256x128xf32>, vector<8x128xf32> -> vector<8x128xf32>
    %c0_3 = arith.constant 0 : index
    %c0_4 = arith.constant 0 : index
    %3 = vector.load %arg4[%c0_3, %c0_4] : memref<8x128xf32, #tpu.memory_space<vmem>>, vector<8x128xf32>
    tpu.vector_store %arg4[%c0_3, %c0_4], %2 {strides = array<i32>} : memref<8x128xf32, #tpu.memory_space<vmem>>, vector<8x128xf32>,
    return
  }
  func.func @transform_0(%arg0: i32, %arg1: i32) -> (i32, i32) {
    %c0_i32 = arith.constant 0 : i32
    %c0_i32_0 = arith.constant 0 : i32
    return %arg1, %c0_i32 : i32, i32
  }
  func.func @transform_1(%arg0: i32, %arg1: i32) -> (i32, i32) {
    %c0_i32 = arith.constant 0 : i32
    %c0_i32_0 = arith.constant 0 : i32
    return %c0_i32, %arg0 : i32, i32
  }
  func.func @transform_2(%arg0: i32, %arg1: i32) -> (i32, i32) {
    %c0_i32 = arith.constant 0 : i32
    return %arg1, %arg0 : i32, i32
  }
}

</mosaic_0001>

<llo_original>
// kernel: tpu_custom_call.1
$region0: #{tpu_custom_call.1}
  #allocation0 [shape = 'u32[]', space=smem, size = 0x4, offset = 0x4, fixed_abs, tag = 'smem constant byte address 0x4 - core index']
  #allocation1 [shape = 'u32[72,128]{1,0:T(1,128)}', space=vmem, size = 0x9000, scoped, tag = 'internal scratch']
  %s0 = inlined_call_operand.hbm [shape: f32[8,256], index: 0, kind: input, shape index: {}]
  %s1 = inlined_call_operand.hbm [shape: f32[256,256], index: 1, kind: input, shape index: {}]
  %s2 = inlined_call_operand.hbm [shape: f32[8,256], index: 2, kind: output, shape index: {}]
  %s3 = sld [smem:[#allocation0]]
  $region49: #{tpu_custom_call.1} parent=0
    _
  %s5 = ssub.s32 1, %s3
  %s6 = scalar_select 0, %s5, %s3
  $region1: #{tpu_custom_call.1} parent=0
    #allocation2 [shape = 'u8[8192]{0}', space=vmem, size = 0x2000, scoped, tag = 'input window, operand 0, single buffered']
    #allocation3 [shape = 's32[2]{0}', space=sflag, size = 0x8, scoped, tag = 'scoped memory for tpu_custom_call.1']
    #allocation4 [shape = 's32[2]{0}', space=sflag, size = 0x8, scoped, tag = 'scoped memory for tpu_custom_call.1']
    #allocation5 [shape = 'u8[262144]{0}', space=vmem, size = 0x40000, scoped, tag = 'input window, operand 1']
    #allocation6 [shape = 's32[2]{0}', space=sflag, size = 0x8, scoped, tag = 'scoped memory for tpu_custom_call.1']
    #allocation7 [shape = 'u8[8192]{0}', space=vmem, size = 0x2000, scoped, tag = 'output window, operand 0']
    %7 = vsyncpa [#allocation3], 0
    %8 = vsyncpa [#allocation6], 0
    %s9 = scalar_lea.sflag [#allocation6], 1
    %10 = vsyncpa %s9, 0
    %11 = vsyncpa [#allocation4], 0
    %s12 = scalar_lea.sflag [#allocation4], 1
    %13 = vsyncpa %s12, 0
    loop: start=0, step=1, limit=4
    $region2: #{tpu_custom_call.1} parent=1 // loop_pre_header
      _
    $region3: #{tpu_custom_call.1} parent=1 // loop_header
      %s15 = sphi 0, %s19
      %p16 = scmp.ge.s32.totalorder %s15, 4
      %s22 = sphi 0, %s34
      %s23 = sphi 0, %s30
      %s24 = sphi 0, %s22
      %s25 = sphi 0, %s23
      %s26 = sphi 0, %s24
      %s27 = sphi 0, %s25
      %s37 = sphi 0, %s39
      %s40 = sphi 0, %s37
      %s41 = sphi 0, %s40
      %s57 = sphi 0, %s41
      %s63 = sphi 0, %s65
      %s66 = sphi 0, %s63
      %s67 = sphi 0, %s66
      %s83 = sphi 0, %s67
      %s91 = sphi 0, %s93
      %s94 = sphi 0, %s91
      %s95 = sphi 0, %s94
      %s111 = sphi 0, %s95
    $region4: #{tpu_custom_call.1} parent=1 // loop_header_branch
      %18 = sbr.rel (%p16) target = $region8
    $region5: #{tpu_custom_call.1} parent=1 // loop_body
      %s20 = ssub.s32 %s15, 1
      %s21 = ssub.s32 %s15, 2
      %s28 = sadd.s32 1, %s23
      %p29 = scmp.ge.s32.totalorder %s28, 1
      %s30 = scalar_select %p29, 0, %s28
      %s31 = sadd.s32 1, %s22
      %s32 = scalar_select %p29, %s31, %s22
      %p33 = scmp.ge.s32.totalorder %s32, 2
      %s34 = scalar_select %p33, 0, %s32
      %s35 = ssub.s32 %s23, %s30
      %p36 = scmp.eq.s32.totalorder %s35, 0
      %s38 = sadd.s32 %s37, 1
      %s39 = scalar_select %p36, %s37, %s38
      %p42 = pneg %p36
      %p43 = scmp.eq.s32.totalorder %s15, 1
      %p44 = por %p42, %p43
      %p45 = scmp.ne.s32.totalorder %s37, %s40
      %p46 = scmp.eq.s32.totalorder %s15, 0
      %p47 = por %p45, %p46
      %p48 = scmp.ne.s32.totalorder %s37, %s40
      %p49 = scmp.eq.s32.totalorder %s20, 1
      %p50 = por %p48, %p49
      %p51 = scmp.ne.s32.totalorder %s40, %s41
      %p52 = scmp.eq.s32.totalorder %s20, 0
      %p53 = por %p51, %p52
      %p54 = scmp.ne.s32.totalorder %s40, %s41
      %p55 = scmp.eq.s32.totalorder %s21, 1
      %p56 = por %p54, %p55
      %p58 = scmp.ne.s32.totalorder %s41, %s57
      %p59 = scmp.eq.s32.totalorder %s21, 0
      %p60 = por %p58, %p59
      %s61 = ssub.s32 %s22, %s34
      %p62 = scmp.eq.s32.totalorder %s61, 0
      %s64 = sadd.s32 %s63, 1
      %s65 = scalar_select %p62, %s63, %s64
      %p68 = pneg %p62
      %p69 = scmp.eq.s32.totalorder %s15, 1
      %p70 = por %p68, %p69
      %p71 = scmp.ne.s32.totalorder %s63, %s66
      %p72 = scmp.eq.s32.totalorder %s15, 0
      %p73 = por %p71, %p72
      %p74 = scmp.ne.s32.totalorder %s63, %s66
      %p75 = scmp.eq.s32.totalorder %s20, 1
      %p76 = por %p74, %p75
      %p77 = scmp.ne.s32.totalorder %s66, %s67
      %p78 = scmp.eq.s32.totalorder %s20, 0
      %p79 = por %p77, %p78
      %p80 = scmp.ne.s32.totalorder %s66, %s67
      %p81 = scmp.eq.s32.totalorder %s21, 1
      %p82 = por %p80, %p81
      %p84 = scmp.ne.s32.totalorder %s67, %s83
      %p85 = scmp.eq.s32.totalorder %s21, 0
      %p86 = por %p84, %p85
      %s87 = ssub.s32 %s23, %s30
      %s88 = ssub.s32 %s22, %s34
      %s89 = sor.u32 %s87, %s88
      %p90 = scmp.eq.s32.totalorder %s89, 0
      %s92 = sadd.s32 %s91, 1
      %s93 = scalar_select %p90, %s91, %s92
      %p96 = pneg %p90
      %p97 = scmp.eq.s32.totalorder %s15, 1
      %p98 = por %p96, %p97
      %p99 = scmp.ne.s32.totalorder %s91, %s94
      %p100 = scmp.eq.s32.totalorder %s15, 0
      %p101 = por %p99, %p100
      %p102 = scmp.ne.s32.totalorder %s91, %s94
      %p103 = scmp.eq.s32.totalorder %s20, 1
      %p104 = por %p102, %p103
      %p105 = scmp.ne.s32.totalorder %s94, %s95
      %p106 = scmp.eq.s32.totalorder %s20, 0
      %p107 = por %p105, %p106
      %p108 = scmp.ne.s32.totalorder %s94, %s95
      %p109 = scmp.eq.s32.totalorder %s21, 1
      %p110 = por %p108, %p109
      %p112 = scmp.ne.s32.totalorder %s95, %s111
      %p113 = scmp.eq.s32.totalorder %s21, 0
      %p114 = por %p112, %p113
      %p115 = scmp.le.s32.totalorder 1, %s15
      %p116 = scmp.lt.s32.totalorder %s15, 3
      %p117 = pnand %p115, %p116
      %p118 = pneg %p117
      // Predicated region
      $region9: #{tpu_custom_call.1} parent=5 // pred_check
        _
      $region10: #{tpu_custom_call.1} parent=5 // pred_check_branch
        %120 = sbr.rel (%p117) target = $region12
      $region11: #{tpu_custom_call.1} parent=5 // pred_region
        %s121 = ssub.s32 %s15, 1
        // Predicated region
        $region13: #{tpu_custom_call.1} parent=11 // pred_check
          %p122 = pneg %p53
        $region14: #{tpu_custom_call.1} parent=11 // pred_check_branch
          %124 = sbr.rel (%p122) target = $region16
        $region15: #{tpu_custom_call.1} parent=11 // pred_region
          %126 = vsyncadd [#allocation3], 0
          %s127 = smul.addr %s25, 2
          %s128 = smul.addr %s127, 8
          %s129 = scalar_lea.hbm %s0, %s128
          %s131 = sshll.u32 %s129, 4
          %s132 = int_to_ptr.hbm [resolvable:$true] %s131
          %s133 = sshll.u32 [#allocation2], 4
          %s134 = int_to_ptr.vmem [resolvable:$true] %s133
          %136 = dma.hbm_to_vmem [thread:$0]  %s132, 256, %s134, [#allocation3]
        $region16: #{tpu_custom_call.1} parent=11 // pred_fallthru
          _
      $region12: #{tpu_custom_call.1} parent=5 // pred_fallthru
        _
      %p137 = scmp.lt.s32.totalorder %s15, 2
      // Predicated region
      $region17: #{tpu_custom_call.1} parent=5 // pred_check
        %p138 = pneg %p137
      $region18: #{tpu_custom_call.1} parent=5 // pred_check_branch
        %140 = sbr.rel (%p138) target = $region20
      $region19: #{tpu_custom_call.1} parent=5 // pred_region
        // Predicated region
        $region21: #{tpu_custom_call.1} parent=19 // pred_check
          %p141 = pneg %p73
        $region22: #{tpu_custom_call.1} parent=19 // pred_check_branch
          %143 = sbr.rel (%p141) target = $region24
        $region23: #{tpu_custom_call.1} parent=19 // pred_region
          %s144 = sand.u32 %s63, 1
          %s145 = scalar_lea.sflag [#allocation6], %s144
          %s146 = sand.u32 %s63, 1
          %s147 = smul.addr %s146, 256
          %s148 = scalar_lea.vmem [#allocation5], %s147
          %150 = vsyncadd %s145, 0
          %s151 = smul.addr %s22, 8
          %s152 = scalar_lea.hbm %s1, %s151
          %s153 = sshll.u32 %s152, 4
          %s154 = int_to_ptr.hbm [resolvable:$true] %s153
          %s155 = sshll.u32 %s148, 4
          %s156 = int_to_ptr.vmem [resolvable:$true] %s155
          %161 = dma.hbm_to_vmem [thread:$0]  %s154, 4096, %s156, %s145, 256, 128, 8
        $region24: #{tpu_custom_call.1} parent=19 // pred_fallthru
          _
      $region20: #{tpu_custom_call.1} parent=5 // pred_fallthru
        _
      %p162 = scmp.le.s32.totalorder 1, %s15
      %p163 = scmp.lt.s32.totalorder %s15, 3
      %p164 = pnand %p162, %p163
      %p165 = pneg %p164
      // Predicated region
      $region25: #{tpu_custom_call.1} parent=5 // pred_check
        _
      $region26: #{tpu_custom_call.1} parent=5 // pred_check_branch
        %167 = sbr.rel (%p164) target = $region28
      $region27: #{tpu_custom_call.1} parent=5 // pred_region
        %s168 = ssub.s32 %s15, 1
        // Predicated region
        $region29: #{tpu_custom_call.1} parent=27 // pred_check
          %p169 = pneg %p53
        $region30: #{tpu_custom_call.1} parent=27 // pred_check_branch
          %171 = sbr.rel (%p169) target = $region32
        $region31: #{tpu_custom_call.1} parent=27 // pred_region
          %173 = dma.done [#allocation3], 256
        $region32: #{tpu_custom_call.1} parent=27 // pred_fallthru
          _
        %s174 = sand.u32 %s66, 1
        %s175 = scalar_lea.sflag [#allocation6], %s174
        %s176 = sand.u32 %s66, 1
        %s177 = smul.addr %s176, 256
        %s178 = scalar_lea.vmem [#allocation5], %s177
        // Predicated region
        $region33: #{tpu_custom_call.1} parent=27 // pred_check
          %p179 = pneg %p79
        $region34: #{tpu_custom_call.1} parent=27 // pred_check_branch
          %181 = sbr.rel (%p179) target = $region36
        $region35: #{tpu_custom_call.1} parent=27 // pred_region
          %183 = dma.done %s175, 4096
        $region36: #{tpu_custom_call.1} parent=27 // pred_fallthru
          _
        %p184 = pneg %p53
        %p185 = pneg %p50
        %s186 = sand.u32 %s66, 1
        %s187 = scalar_lea.sflag [#allocation6], %s186
        %s188 = sand.u32 %s66, 1
        %s189 = smul.addr %s188, 256
        %s190 = scalar_lea.vmem [#allocation5], %s189
        %p191 = pneg %p79
        %p192 = pneg %p76
        %p193 = pneg %p107
        %p194 = pneg %p104
        %s195 = sand.u32 %s94, 1
        %s196 = scalar_lea.sflag [#allocation4], %s195
        %s197 = sand.u32 %s94, 1
        %s198 = smul.addr %s197, 8
        %s199 = scalar_lea.vmem [#allocation7], %s198
        %v200 = vld [vmem:[#allocation2] sm:$0xff]
        %v201 = vld [vmem:[#allocation2 + $0x8] sm:$0xff]
        %v202 = vld [vmem:[%s178] sm:$0xff]
        %v203 = vld [vmem:[%s178 + $0x8] sm:$0xff]
        %v204 = vld [vmem:[%s178 + $0x10] sm:$0xff]
        %v205 = vld [vmem:[%s178 + $0x18] sm:$0xff]
        %v206 = vld [vmem:[%s178 + $0x20] sm:$0xff]
        %v207 = vld [vmem:[%s178 + $0x28] sm:$0xff]
        %v208 = vld [vmem:[%s178 + $0x30] sm:$0xff]
        %v209 = vld [vmem:[%s178 + $0x38] sm:$0xff]
        %v210 = vld [vmem:[%s178 + $0x40] sm:$0xff]
        %v211 = vld [vmem:[%s178 + $0x48] sm:$0xff]
        %v212 = vld [vmem:[%s178 + $0x50] sm:$0xff]
        %v213 = vld [vmem:[%s178 + $0x58] sm:$0xff]
        %v214 = vld [vmem:[%s178 + $0x60] sm:$0xff]
        %v215 = vld [vmem:[%s178 + $0x68] sm:$0xff]
        %v216 = vld [vmem:[%s178 + $0x70] sm:$0xff]
        %v217 = vld [vmem:[%s178 + $0x78] sm:$0xff]
        %v218 = vld [vmem:[%s178 + $0x80] sm:$0xff]
        %v219 = vld [vmem:[%s178 + $0x88] sm:$0xff]
        %v220 = vld [vmem:[%s178 + $0x90] sm:$0xff]
        %v221 = vld [vmem:[%s178 + $0x98] sm:$0xff]
        %v222 = vld [vmem:[%s178 + $0xa0] sm:$0xff]
        %v223 = vld [vmem:[%s178 + $0xa8] sm:$0xff]
        %v224 = vld [vmem:[%s178 + $0xb0] sm:$0xff]
        %v225 = vld [vmem:[%s178 + $0xb8] sm:$0xff]
        %v226 = vld [vmem:[%s178 + $0xc0] sm:$0xff]
        %v227 = vld [vmem:[%s178 + $0xc8] sm:$0xff]
        %v228 = vld [vmem:[%s178 + $0xd0] sm:$0xff]
        %v229 = vld [vmem:[%s178 + $0xd8] sm:$0xff]
        %v230 = vld [vmem:[%s178 + $0xe0] sm:$0xff]
        %v231 = vld [vmem:[%s178 + $0xe8] sm:$0xff]
        %v232 = vld [vmem:[%s178 + $0xf0] sm:$0xff]
        %v233 = vld [vmem:[%s178 + $0xf8] sm:$0xff]
        %234 = vmatpush.msra.mxu0 %v217
        %235 = vmatpush.msra.mxu0 %v216
        %236 = vmatpush.msra.mxu0 %v215
        %237 = vmatpush.msra.mxu0 %v214
        %238 = vmatpush.msra.mxu0 %v213
        %239 = vmatpush.msra.mxu0 %v212
        %240 = vmatpush.msra.mxu0 %v211
        %241 = vmatpush.msra.mxu0 %v210
        %242 = vmatpush.msra.mxu0 %v209
        %243 = vmatpush.msra.mxu0 %v208
        %244 = vmatpush.msra.mxu0 %v207
        %245 = vmatpush.msra.mxu0 %v206
        %246 = vmatpush.msra.mxu0 %v205
        %247 = vmatpush.msra.mxu0 %v204
        %248 = vmatpush.msra.mxu0 %v203
        %249 = vmatpush.msra.mxu0 %v202
        %250 = vmatmul.f32.gmra.mxu0 %v200
        %v251 = vpop.f32.mrf.mxu0
        %v252 = vadd.f32 0.0, %v251
        %253 = vdwg.mxu0
        %254 = vmatpush.msra.mxu0 %v233
        %255 = vmatpush.msra.mxu0 %v232
        %256 = vmatpush.msra.mxu0 %v231
        %257 = vmatpush.msra.mxu0 %v230
        %258 = vmatpush.msra.mxu0 %v229
        %259 = vmatpush.msra.mxu0 %v228
        %260 = vmatpush.msra.mxu0 %v227
        %261 = vmatpush.msra.mxu0 %v226
        %262 = vmatpush.msra.mxu0 %v225
        %263 = vmatpush.msra.mxu0 %v224
        %264 = vmatpush.msra.mxu0 %v223
        %265 = vmatpush.msra.mxu0 %v222
        %266 = vmatpush.msra.mxu0 %v221
        %267 = vmatpush.msra.mxu0 %v220
        %268 = vmatpush.msra.mxu0 %v219
        %269 = vmatpush.msra.mxu0 %v218
        %270 = vmatmul.f32.gmra.mxu0 %v201
        %v271 = vpop.f32.mrf.mxu0
        %v272 = vadd.f32 %v252, %v271
        %273 = vdwg.mxu0
        %274 = vst [vmem:[%s199] sm:$0xff] %v272
        %s275 = sand.u32 %s94, 1
        %s276 = scalar_lea.sflag [#allocation4], %s275
        %s277 = sand.u32 %s94, 1
        %s278 = smul.addr %s277, 8
        %s279 = scalar_lea.vmem [#allocation7], %s278
        // Predicated region
        $region37: #{tpu_custom_call.1} parent=27 // pred_check
          %p280 = pneg %p104
        $region38: #{tpu_custom_call.1} parent=27 // pred_check_branch
          %282 = sbr.rel (%p280) target = $region40
        $region39: #{tpu_custom_call.1} parent=27 // pred_region
          %284 = vsyncadd %s276, 0
          %s285 = smul.addr %s25, 2
          %s286 = sadd.s32 %s24, %s285
          %s287 = smul.addr %s286, 8
          %s288 = scalar_lea.hbm %s2, %s287
          %s290 = sshll.u32 %s279, 4
          %s291 = int_to_ptr.vmem [resolvable:$true] %s290
          %s292 = sshll.u32 %s288, 4
          %s293 = int_to_ptr.hbm [resolvable:$true] %s292
          %295 = dma.vmem_to_hbm [thread:$0]  %s291, 128, %s293, %s276
        $region40: #{tpu_custom_call.1} parent=27 // pred_fallthru
          _
      $region28: #{tpu_custom_call.1} parent=5 // pred_fallthru
        _
      %p296 = scmp.le.s32.totalorder 2, %s15
      // Predicated region
      $region41: #{tpu_custom_call.1} parent=5 // pred_check
        %p297 = pneg %p296
      $region42: #{tpu_custom_call.1} parent=5 // pred_check_branch
        %299 = sbr.rel (%p297) target = $region44
      $region43: #{tpu_custom_call.1} parent=5 // pred_region
        %s300 = ssub.s32 %s15, 2
        // Predicated region
        $region45: #{tpu_custom_call.1} parent=43 // pred_check
          %p301 = pneg %p110
        $region46: #{tpu_custom_call.1} parent=43 // pred_check_branch
          %303 = sbr.rel (%p301) target = $region48
        $region47: #{tpu_custom_call.1} parent=43 // pred_region
          %s304 = sand.u32 %s95, 1
          %s305 = scalar_lea.sflag [#allocation4], %s304
          %s306 = sand.u32 %s95, 1
          %s307 = smul.addr %s306, 8
          %s308 = scalar_lea.vmem [#allocation7], %s307
          %310 = dma.done %s305, 128
        $region48: #{tpu_custom_call.1} parent=43 // pred_fallthru
          _
      $region44: #{tpu_custom_call.1} parent=5 // pred_fallthru
        _
    $region6: #{tpu_custom_call.1} parent=1 // loop_footer
      %s19 = sadd.s32 1, %s15
    $region7: #{tpu_custom_call.1} parent=1 // loop_footer_branch
      %14 = sbr.rel target = $region3
    $region8: #{tpu_custom_call.1} parent=1 // loop_exit
      _
    %311 = vsyncpa [#allocation3], 1
    %s312 = scalar_lea.sflag [#allocation3], 1
    %313 = vsyncpa %s312, 1
    %314 = vsyncpa [#allocation6], 1
    %s315 = scalar_lea.sflag [#allocation6], 1
    %316 = vsyncpa %s315, 1
    %317 = vsyncpa [#allocation4], 1
    %s318 = scalar_lea.sflag [#allocation4], 1
    %319 = vsyncpa %s318, 1

</llo_original>
